<compile_context>
chip_gen: v6e
topology: v6e:2x2x1
jax: 0.10.0
libtpu: 0.0.40
codegen_flags: <defaults>
</compile_context>

<pallas_src>
import functools

import numpy as np

import jax
import jax.numpy as jnp
from jax.experimental import pallas as pl
from jax.experimental.pallas import tpu as pltpu


# ---------------------------------------------------------------------------
# Kernel 1: fused style projections.  One launch computes:
#   styles1 = (ws0 @ W1g.T + b1) * rsqrt(mean(styles1^2))     (batch-global norm)
#   dcoef   = rsqrt(sum_i W2[o,i] * styles1[b,i]^2 + eps)     (demod coefficients)
#   styles2 = (ws1 @ W2g.T + b2)                              (torgb gain folded in)
# Weight/bias gains are folded into the operands in the wrapper.
# ---------------------------------------------------------------------------
def _styles_kernel(ws0_ref, ws1_ref, w1t_ref, b1_ref, w2t_ref, b2_ref,
                   w2sq_t_ref, s1_ref, dc_ref, s2_ref, *, demod_eps):
    s1 = jnp.dot(ws0_ref[...], w1t_ref[...],
                 preferred_element_type=jnp.float32) + b1_ref[...]
    s1 = s1 * jax.lax.rsqrt(jnp.mean(s1 * s1))          # batch-global style norm
    s1_ref[...] = s1
    d = jnp.dot(s1 * s1, w2sq_t_ref[...], preferred_element_type=jnp.float32)
    dc_ref[...] = jax.lax.rsqrt(d + demod_eps)          # demodulation coefficients
    s2 = jnp.dot(ws1_ref[...], w2t_ref[...],
                 preferred_element_type=jnp.float32) + b2_ref[...]
    s2_ref[...] = s2


# ---------------------------------------------------------------------------
# Kernel 2: per batch-block fused {3x3 modulated+demodulated conv + noise + bias
# + lrelu_agc} followed by the 1x1 toRGB modulated conv (no demod) + bias.
# Taps are built in VMEM via lane rolls (no HBM patches); one bf16 MXU GEMM
# (C, 9C) @ (9C, BB*HW) with f32 accumulation covers all taps and all images.
# ---------------------------------------------------------------------------
def _synth_block_kernel(x_ref, s1_ref, dc_ref, wflat_ref, b1_ref, noise_ref,
                        s2_ref, wrgb_ref, brgb_ref, x_out_ref, img_out_ref, *,
                        bb_n, H, W, alpha, act_gain, act_clamp,
                        noise_per_image, gemm_dtype):
    HW = x_out_ref.shape[2]

    # Tap boundary masks, built once (hoisted above the tap loop).
    lane = jax.lax.broadcasted_iota(jnp.int32, (1, HW), 1)
    yy = lane // W
    xx = lane - yy * W
    vmask = {-1: yy >= 1, 0: None, 1: yy <= H - 2}
    hmask = {-1: xx >= 1, 0: None, 1: xx <= W - 2}

    # Build the modulated im2col slab:
    #   slab[t*C + i, bb*HW + hw] = styles1[bb, i] * x[bb, i, shift(hw, t)]
    # (style folded into activation rows so the weight is shared across images).
    cols = []
    for bb in range(bb_n):
        x_mod = x_ref[bb].astype(jnp.float32) * s1_ref[bb]       # (C, HW) * (C, 1)
        taps = []
        for dy in (-1, 0, 1):
            for dx in (-1, 0, 1):
                off = dy * W + dx
                t = x_mod if off == 0 else pltpu.roll(
                    x_mod, shift=(-off) % HW, axis=1)
                m = vmask[dy]
                if hmask[dx] is not None:
                    m = hmask[dx] if m is None else jnp.logical_and(m, hmask[dx])
                if m is not None:
                    t = jnp.where(m, t, 0.0)
                taps.append(t.astype(gemm_dtype))
        cols.append(jnp.concatenate(taps, axis=0))               # (9C, HW)
    slab = cols[0] if bb_n == 1 else jnp.concatenate(cols, axis=1)

    # Single fused MXU GEMM (bf16 operands, f32 accumulation).
    acc = jnp.dot(wflat_ref[...], slab, preferred_element_type=jnp.float32)

    b1 = b1_ref[...]                                             # (C, 1)
    wrgb = wrgb_ref[...]                                         # (Rp, C)
    brgb = brgb_ref[...]                                         # (Rp, 1)
    for bb in range(bb_n):
        y = acc[:, bb * HW:(bb + 1) * HW] * dc_ref[bb]           # demodulate
        nz = noise_ref[bb] if noise_per_image else noise_ref[0]  # (1, HW)
        y = y + nz + b1
        y = jnp.where(y >= 0.0, y, alpha * y) * act_gain         # lrelu_agc
        y = jnp.clip(y, -act_clamp, act_clamp)
        x_out_ref[bb] = y.astype(x_out_ref.dtype)

        # torgb: 1x1 modulated conv (demodulate=False) + bias; style folded into y rows.
        rgb = jnp.dot(wrgb, y * s2_ref[bb], preferred_element_type=jnp.float32)
        img_out_ref[bb] = (rgb + brgb).astype(img_out_ref.dtype)


# ---------------------------------------------------------------------------
# Wrapper
# ---------------------------------------------------------------------------
def synthesis_block_forward(params, ws, *, noise_mode="const", gain=1.0,
                            noise_key=None, batch_block=None,
                            gemm_dtype=jnp.bfloat16):
    """Forward of synthesis_block with ic_n=0 (const input) and rgb output."""
    f32 = jnp.float32
    const = params["const"]
    C, H, W = const.shape
    HW = H * W
    B = ws.shape[0]
    w_dim = ws.shape[-1]

    c1 = params["conv1"]
    tr = params["torgb"]
    R = tr["weight"].shape[0]
    Rp = max(8, int(np.ceil(R / 8) * 8))        # sublane-dense padded RGB channels

    # ---- hoisted style-independent weight statistics (computed once, XLA side) ----
    w_raw = c1["weight"].astype(f32)                                      # (C, C, 3, 3)
    w_norm = w_raw * jax.lax.rsqrt(
        jnp.mean(w_raw * w_raw, axis=(1, 2, 3), keepdims=True))
    # wflat[o, t*C + i] = w_norm[o, i, ky, kx]  with t = ky*3 + kx
    wflat = jnp.transpose(w_norm, (0, 2, 3, 1)).reshape(C, 9 * C).astype(gemm_dtype)
    w2sq_t = jnp.sum(w_norm * w_norm, axis=(2, 3)).T                      # [i, o]

    # ---- fused style-projection kernel (replaces two dense launches) ----
    sqrt_wd = float(np.sqrt(w_dim))
    rgb_gain = float(1.0 / np.sqrt(C))                    # torgb conv weight_gain
    w1t = (c1["affine_w"].astype(f32) / sqrt_wd).T                        # (w_dim, C)
    b1r = c1["affine_b"].astype(f32).reshape(1, C)
    w2t = (tr["affine_w"].astype(f32) * (rgb_gain / sqrt_wd)).T
    b2r = (tr["affine_b"].astype(f32) * rgb_gain).reshape(1, C)

    styles1, dcoef, styles2 = pl.pallas_call(
        functools.partial(_styles_kernel, demod_eps=1e-8),
        out_shape=(jax.ShapeDtypeStruct((B, C), f32),
                   jax.ShapeDtypeStruct((B, C), f32),
                   jax.ShapeDtypeStruct((B, C), f32)),
        grid=(1,),
        in_specs=[pl.BlockSpec((B, w_dim), lambda i: (0, 0)),
                  pl.BlockSpec((B, w_dim), lambda i: (0, 0)),
                  pl.BlockSpec((w_dim, C), lambda i: (0, 0)),
                  pl.BlockSpec((1, C), lambda i: (0, 0)),
                  pl.BlockSpec((w_dim, C), lambda i: (0, 0)),
                  pl.BlockSpec((1, C), lambda i: (0, 0)),
                  pl.BlockSpec((C, C), lambda i: (0, 0))],
        out_specs=(pl.BlockSpec((B, C), lambda i: (0, 0)),
                   pl.BlockSpec((B, C), lambda i: (0, 0)),
                   pl.BlockSpec((B, C), lambda i: (0, 0))),
    )(ws[:, 0].astype(f32), ws[:, 1].astype(f32), w1t, b1r, w2t, b2r, w2sq_t)

    s1c = styles1.reshape(B, C, 1)
    dcc = dcoef.reshape(B, C, 1)
    s2c = styles2.reshape(B, C, 1)

    # x = const.unsqueeze(0).repeat(B), lane-dense, bf16 to halve HBM/DMA bytes.
    # TODO(synk): for ic_n==0 x is identical across the batch and could be passed once
    #             with a constant index_map instead of broadcasting.
    x = jnp.broadcast_to(const.reshape(1, C, HW), (B, C, HW)).astype(gemm_dtype)

    # Noise (synthesis_layer use_noise=True).
    if noise_mode == "const":
        noise = (c1["noise_const"].astype(f32) * c1["noise_strength"]).reshape(1, 1, HW)
        noise_per_image = False
    elif noise_mode == "none":
        noise = jnp.zeros((1, 1, HW), f32)
        noise_per_image = False
    elif noise_mode == "random":
        if noise_key is None:
            raise ValueError("noise_mode='random' requires noise_key")
        noise = jax.random.normal(noise_key, (B, 1, HW), f32) * c1["noise_strength"]
        noise_per_image = True
    else:
        raise ValueError(noise_mode)

    # torgb weight/bias padded to Rp sublanes (unmasked stores); sliced back below.
    wrgb = jnp.pad(tr["weight"][:, :, 0, 0].astype(f32), ((0, Rp - R), (0, 0)))
    brgb = jnp.pad(tr["bias"].astype(f32).reshape(R, 1), ((0, Rp - R), (0, 0)))
    b1c = c1["bias"].astype(f32).reshape(C, 1)

    # Batch blocking: keep >=2 grid steps when B>=2 (v7x dual TC), cap per-step slab.
    if batch_block is None:
        slab_bytes = 9 * C * HW * jnp.dtype(gemm_dtype).itemsize
        cap = max(1, (4 << 20) // max(1, slab_bytes))
        min_steps = 2 if B >= 2 else 1
        cands = [d for d in range(1, B + 1)
                 if B % d == 0 and d <= cap and B // d >= min_steps]
        batch_block = max(cands) if cands else 1
    assert B % batch_block == 0
    BB = batch_block
    nb = B // BB

    kernel = functools.partial(
        _synth_block_kernel,
        bb_n=BB, H=H, W=W, alpha=0.2,
        act_gain=float(np.sqrt(2.0) * gain), act_clamp=float(256.0 * gain),
        noise_per_image=noise_per_image, gemm_dtype=gemm_dtype)

    noise_spec = (pl.BlockSpec((BB, 1, HW), lambda g: (g, 0, 0)) if noise_per_image
                  else pl.BlockSpec((1, 1, HW), lambda g: (0, 0, 0)))

    itemsize = jnp.dtype(gemm_dtype).itemsize
    cost = pl.CostEstimate(
        flops=int(B * (2 * 9 * C * C * HW + 2 * Rp * C * HW)),
        transcendentals=0,
        bytes_accessed=int(B * C * HW * itemsize                  # x (bf16)
                           + nb * (9 * C * C * itemsize + Rp * C * 4 + (Rp + C) * 4)
                           + B * (C + Rp) * HW * 4                # outputs
                           + B * 3 * C * 4 + HW * 4))

    x_out, img_out = pl.pallas_call(
        kernel,
        out_shape=(jax.ShapeDtypeStruct((B, C, HW), f32),
                   jax.ShapeDtypeStruct((B, Rp, HW), f32)),
        grid=(nb,),
        in_specs=[
            pl.BlockSpec((BB, C, HW), lambda g: (g, 0, 0)),   # x (bf16, lane-dense)
            pl.BlockSpec((BB, C, 1), lambda g: (g, 0, 0)),    # normalized styles1
            pl.BlockSpec((BB, C, 1), lambda g: (g, 0, 0)),    # demod coefficients
            pl.BlockSpec((C, 9 * C), lambda g: (0, 0)),       # pre-normalized conv weight
            pl.BlockSpec((C, 1), lambda g: (0, 0)),           # conv bias
            noise_spec,                                       # noise
            pl.BlockSpec((BB, C, 1), lambda g: (g, 0, 0)),    # torgb styles (gain folded)
            pl.BlockSpec((Rp, C), lambda g: (0, 0)),          # torgb weight (padded)
            pl.BlockSpec((Rp, 1), lambda g: (0, 0)),          # torgb bias (padded)
        ],
        out_specs=(pl.BlockSpec((BB, C, HW), lambda g: (g, 0, 0)),
                   pl.BlockSpec((BB, Rp, HW), lambda g: (g, 0, 0))),
        compiler_params=pltpu.CompilerParams(dimension_semantics=("parallel",)),
        cost_estimate=cost,
    )(x, s1c, dcc, wflat, b1c, noise, s2c, wrgb, brgb)

    x_out = x_out.reshape(B, C, H, W)
    img = img_out[:, :R].reshape(B, R, H, W)
    return x_out, img


# ---------------------------------------------------------------------------
# Pure-JAX reference (independent transcription of the PyTorch forward).
# ---------------------------------------------------------------------------
def _reference_forward(params, ws, *, noise_mode="const", gain=1.0):
    HP = jax.lax.Precision.HIGHEST
    const = params["const"]
    C, H, W = const.shape
    B, _, w_dim = ws.shape
    x = jnp.broadcast_to(const[None], (B, C, H, W)).astype(jnp.float32)

    def dense(z, w, b, wg):
        return jnp.dot(z, (w * wg).T, precision=HP) + b[None, :]

    # conv1: modulated_conv2d(demodulate=True, fused) + noise + bias + lrelu_agc
    c1 = params["conv1"]
    styles = dense(ws[:, 0], c1["affine_w"], c1["affine_b"], 1.0 / np.sqrt(w_dim))
    weight = c1["weight"]
    weight = weight * jax.lax.rsqrt(jnp.mean(weight ** 2, axis=(1, 2, 3), keepdims=True))
    styles_n = styles * jax.lax.rsqrt(jnp.mean(styles ** 2))
    w = weight[None] * styles_n[:, None, :, None, None]            # (B, C, C, 3, 3)
    dco = jax.lax.rsqrt(jnp.sum(w ** 2, axis=(2, 3, 4)) + 1e-8)    # (B, C)
    w = w * dco[:, :, None, None, None]
    y = jax.lax.conv_general_dilated(
        x.reshape(1, B * C, H, W), w.reshape(B * C, C, 3, 3),
        window_strides=(1, 1), padding=((1, 1), (1, 1)),
        dimension_numbers=("NCHW", "OIHW", "NCHW"),
        feature_group_count=B, precision=HP).reshape(B, C, H, W)
    if noise_mode == "const":
        y = y + (c1["noise_const"] * c1["noise_strength"])[None, None]
    y = y + c1["bias"].reshape(1, -1, 1, 1)
    y = jnp.where(y >= 0, y, 0.2 * y) * (np.sqrt(2.0) * gain)
    y = jnp.clip(y, -256.0 * gain, 256.0 * gain)

    # torgb: modulated_conv2d(demodulate=False, 1x1) + bias
    tr = params["torgb"]
    s2 = dense(ws[:, 1], tr["affine_w"], tr["affine_b"], 1.0 / np.sqrt(w_dim)) / np.sqrt(C)
    wm = tr["weight"][:, :, 0, 0][None] * s2[:, None, :]            # (B, R, C)
    rgb = jnp.einsum("brc,bchw->brhw", wm, y, precision=HP)
    rgb = rgb + tr["bias"].reshape(1, -1, 1, 1)
    return y, rgb.astype(jnp.float32)


if __name__ == "__main__":
    key = jax.random.PRNGKey(0)
    B, C, R, H, w_dim = 2, 16, 3, 16, 32   # batch, oc_n, rgb_n, resolution, w_dim
    ks = jax.random.split(key, 9)

    params = {
        "const": jax.random.normal(ks[0], (C, H, H), jnp.float32),
        "conv1": {
            "weight": jax.random.normal(ks[1], (C, C, 3, 3), jnp.float32),
            "bias": 0.1 * jax.random.normal(ks[2], (C,), jnp.float32),
            "affine_w": jax.random.normal(ks[3], (C, w_dim), jnp.float32),
            "affine_b": jnp.ones((C,), jnp.float32),                # dense bias_init=1
            "noise_const": jax.random.normal(ks[4], (H, H), jnp.float32),
            "noise_strength": jnp.float32(0.1),
        },
        "torgb": {
            "weight": jax.random.normal(ks[5], (R, C, 1, 1), jnp.float32),
            "bias": 0.1 * jax.random.normal(ks[6], (R,), jnp.float32),
            "affine_w": jax.random.normal(ks[7], (C, w_dim), jnp.float32),
            "affine_b": jnp.ones((C,), jnp.float32),
        },
    }
    ws = jax.random.normal(ks[8], (B, 2, w_dim), jnp.float32)       # num_conv + num_torgb

    x_out, img_out = synthesis_block_forward(params, ws, noise_mode="const")
    x_out, img_out = jax.block_until_ready((x_out, img_out))

    x_ref, img_ref = _reference_forward(params, ws, noise_mode="const")
    assert x_out.shape == (B, C, H, H) and img_out.shape == (B, R, H, H)

    def _check(name, got, ref):
        # bf16 GEMM operands (f32 accumulation) -> tolerance covers operand rounding.
        max_abs = float(jnp.max(jnp.abs(got - ref)))
        rel = float(jnp.linalg.norm(got - ref) / (jnp.linalg.norm(ref) + 1e-12))
        assert max_abs < 1e-1 and rel < 2e-2, (name, max_abs, rel)

    _check("x", x_out, x_ref)
    _check("img", img_out, img_ref)

    print("KERNEL_OK")
</pallas_src>

<mosaic_0001>
module attributes {stable_mosaic.version = 11 : i64} {
  func.func @_styles_kernel(%arg0: i32, %arg1: memref<2x32xf32, #tpu.memory_space<vmem>>, %arg2: memref<2x32xf32, #tpu.memory_space<vmem>>, %arg3: memref<32x16xf32, #tpu.memory_space<vmem>>, %arg4: memref<1x16xf32, #tpu.memory_space<vmem>>, %arg5: memref<32x16xf32, #tpu.memory_space<vmem>>, %arg6: memref<1x16xf32, #tpu.memory_space<vmem>>, %arg7: memref<16x16xf32, #tpu.memory_space<vmem>>, %arg8: memref<2x16xf32, #tpu.memory_space<vmem>>, %arg9: memref<2x16xf32, #tpu.memory_space<vmem>>, %arg10: memref<2x16xf32, #tpu.memory_space<vmem>>) attributes {dimension_semantics = [#tpu.dimension_semantics<arbitrary>], iteration_bounds = array<i64: 1>, scalar_prefetch = 0 : i64, scratch_operands = 0 : i64, tpu.core_type = #tpu.core_type<tc>, window_params = [{pipeline_mode = #tpu.pipeline_mode<synchronous>, transform_indices = @transform_0, window_bounds = array<i64: 2, 32>}, {pipeline_mode = #tpu.pipeline_mode<synchronous>, transform_indices = @transform_1, window_bounds = array<i64: 2, 32>}, {pipeline_mode = #tpu.pipeline_mode<synchronous>, transform_indices = @transform_2, window_bounds = array<i64: 32, 16>}, {pipeline_mode = #tpu.pipeline_mode<synchronous>, transform_indices = @transform_3, window_bounds = array<i64: 1, 16>}, {pipeline_mode = #tpu.pipeline_mode<synchronous>, transform_indices = @transform_4, window_bounds = array<i64: 32, 16>}, {pipeline_mode = #tpu.pipeline_mode<synchronous>, transform_indices = @transform_5, window_bounds = array<i64: 1, 16>}, {pipeline_mode = #tpu.pipeline_mode<synchronous>, transform_indices = @transform_6, window_bounds = array<i64: 16, 16>}, {pipeline_mode = #tpu.pipeline_mode<synchronous>, transform_indices = @transform_7, window_bounds = array<i64: 2, 16>}, {pipeline_mode = #tpu.pipeline_mode<synchronous>, transform_indices = @transform_8, window_bounds = array<i64: 2, 16>}, {pipeline_mode = #tpu.pipeline_mode<synchronous>, transform_indices = @transform_9, window_bounds = array<i64: 2, 16>}]} {
    %c0 = arith.constant 0 : index
    %c0_0 = arith.constant 0 : index
    %0 = vector.load %arg1[%c0, %c0_0] : memref<2x32xf32, #tpu.memory_space<vmem>>, vector<2x32xf32>
    %c0_1 = arith.constant 0 : index
    %c0_2 = arith.constant 0 : index
    %1 = vector.load %arg3[%c0_1, %c0_2] : memref<32x16xf32, #tpu.memory_space<vmem>>, vector<32x16xf32>
    %cst = arith.constant dense<0.000000e+00> : vector<2x16xf32>
    %2 = tpu.matmul %0, %1, %cst {dimension_numbers = #tpu.dot_dimension_numbers<[1], [0], [0], [1], [0, 0, 1, 1], [], []>} : vector<2x32xf32>, vector<32x16xf32>, vector<2x16xf32> -> vector<2x16xf32>
    %c0_3 = arith.constant 0 : index
    %c0_4 = arith.constant 0 : index
    %3 = vector.load %arg4[%c0_3, %c0_4] : memref<1x16xf32, #tpu.memory_space<vmem>>, vector<1x16xf32>
    %4 = vector.broadcast %3 : vector<1x16xf32> to vector<2x16xf32>
    %5 = arith.addf %2, %4 : vector<2x16xf32>
    %6 = arith.mulf %5, %5 : vector<2x16xf32>
    %7 = vector.shape_cast %6 : vector<2x16xf32> to vector<1x2x16xf32>
    %cst_5 = arith.constant dense<0.000000e+00> : vector<1xf32>
    %8 = vector.multi_reduction <add>, %7, %cst_5 [1, 2] : vector<1x2x16xf32> to vector<1xf32>
    %9 = vector.shape_cast %8 : vector<1xf32> to vector<1x1x1xf32>
    %10 = vector.extract %9[0, 0, 0] : f32 from vector<1x1x1xf32>
    %cst_6 = arith.constant 3.200000e+01 : f32
    %11 = arith.divf %10, %cst_6 : f32
    %12 = math.rsqrt %11 : f32
    %13 = vector.broadcast %12 : f32 to vector<2x16xf32>
    %14 = arith.mulf %5, %13 : vector<2x16xf32>
    %c0_7 = arith.constant 0 : index
    %c0_8 = arith.constant 0 : index
    %15 = vector.load %arg8[%c0_7, %c0_8] : memref<2x16xf32, #tpu.memory_space<vmem>>, vector<2x16xf32>
    tpu.vector_store %arg8[%c0_7, %c0_8], %14 {strides = array<i32>} : memref<2x16xf32, #tpu.memory_space<vmem>>, vector<2x16xf32>,
    %16 = arith.mulf %14, %14 : vector<2x16xf32>
    %c0_9 = arith.constant 0 : index
    %c0_10 = arith.constant 0 : index
    %17 = vector.load %arg7[%c0_9, %c0_10] : memref<16x16xf32, #tpu.memory_space<vmem>>, vector<16x16xf32>
    %cst_11 = arith.constant dense<0.000000e+00> : vector<2x16xf32>
    %18 = tpu.matmul %16, %17, %cst_11 {dimension_numbers = #tpu.dot_dimension_numbers<[1], [0], [0], [1], [0, 0, 1, 1], [], []>} : vector<2x16xf32>, vector<16x16xf32>, vector<2x16xf32> -> vector<2x16xf32>
    %cst_12 = arith.constant 9.99999993E-9 : f32
    %19 = vector.broadcast %cst_12 : f32 to vector<2x16xf32>
    %20 = arith.addf %18, %19 : vector<2x16xf32>
    %21 = math.rsqrt %20 : vector<2x16xf32>
    %c0_13 = arith.constant 0 : index
    %c0_14 = arith.constant 0 : index
    %22 = vector.load %arg9[%c0_13, %c0_14] : memref<2x16xf32, #tpu.memory_space<vmem>>, vector<2x16xf32>
    tpu.vector_store %arg9[%c0_13, %c0_14], %21 {strides = array<i32>} : memref<2x16xf32, #tpu.memory_space<vmem>>, vector<2x16xf32>,
    %c0_15 = arith.constant 0 : index
    %c0_16 = arith.constant 0 : index
    %23 = vector.load %arg2[%c0_15, %c0_16] : memref<2x32xf32, #tpu.memory_space<vmem>>, vector<2x32xf32>
    %c0_17 = arith.constant 0 : index
    %c0_18 = arith.constant 0 : index
    %24 = vector.load %arg5[%c0_17, %c0_18] : memref<32x16xf32, #tpu.memory_space<vmem>>, vector<32x16xf32>
    %cst_19 = arith.constant dense<0.000000e+00> : vector<2x16xf32>
    %25 = tpu.matmul %23, %24, %cst_19 {dimension_numbers = #tpu.dot_dimension_numbers<[1], [0], [0], [1], [0, 0, 1, 1], [], []>} : vector<2x32xf32>, vector<32x16xf32>, vector<2x16xf32> -> vector<2x16xf32>
    %c0_20 = arith.constant 0 : index
    %c0_21 = arith.constant 0 : index
    %26 = vector.load %arg6[%c0_20, %c0_21] : memref<1x16xf32, #tpu.memory_space<vmem>>, vector<1x16xf32>
    %27 = vector.broadcast %26 : vector<1x16xf32> to vector<2x16xf32>
    %28 = arith.addf %25, %27 : vector<2x16xf32>
    %c0_22 = arith.constant 0 : index
    %c0_23 = arith.constant 0 : index
    %29 = vector.load %arg10[%c0_22, %c0_23] : memref<2x16xf32, #tpu.memory_space<vmem>>, vector<2x16xf32>
    tpu.vector_store %arg10[%c0_22, %c0_23], %28 {strides = array<i32>} : memref<2x16xf32, #tpu.memory_space<vmem>>, vector<2x16xf32>,
    return
  }
  func.func @transform_0(%arg0: i32) -> (i32, i32) {
    %c0_i32 = arith.constant 0 : i32
    %c0_i32_0 = arith.constant 0 : i32
    %c0_i32_1 = arith.constant 0 : i32
    return %c0_i32, %c0_i32_0 : i32, i32
  }
  func.func @transform_1(%arg0: i32) -> (i32, i32) {
    %c0_i32 = arith.constant 0 : i32
    %c0_i32_0 = arith.constant 0 : i32
    %c0_i32_1 = arith.constant 0 : i32
    return %c0_i32, %c0_i32_0 : i32, i32
  }
  func.func @transform_2(%arg0: i32) -> (i32, i32) {
    %c0_i32 = arith.constant 0 : i32
    %c0_i32_0 = arith.constant 0 : i32
    %c0_i32_1 = arith.constant 0 : i32
    return %c0_i32, %c0_i32_0 : i32, i32
  }
  func.func @transform_3(%arg0: i32) -> (i32, i32) {
    %c0_i32 = arith.constant 0 : i32
    %c0_i32_0 = arith.constant 0 : i32
    %c0_i32_1 = arith.constant 0 : i32
    return %c0_i32, %c0_i32_0 : i32, i32
  }
  func.func @transform_4(%arg0: i32) -> (i32, i32) {
    %c0_i32 = arith.constant 0 : i32
    %c0_i32_0 = arith.constant 0 : i32
    %c0_i32_1 = arith.constant 0 : i32
    return %c0_i32, %c0_i32_0 : i32, i32
  }
  func.func @transform_5(%arg0: i32) -> (i32, i32) {
    %c0_i32 = arith.constant 0 : i32
    %c0_i32_0 = arith.constant 0 : i32
    %c0_i32_1 = arith.constant 0 : i32
    return %c0_i32, %c0_i32_0 : i32, i32
  }
  func.func @transform_6(%arg0: i32) -> (i32, i32) {
    %c0_i32 = arith.constant 0 : i32
    %c0_i32_0 = arith.constant 0 : i32
    %c0_i32_1 = arith.constant 0 : i32
    return %c0_i32, %c0_i32_0 : i32, i32
  }
  func.func @transform_7(%arg0: i32) -> (i32, i32) {
    %c0_i32 = arith.constant 0 : i32
    %c0_i32_0 = arith.constant 0 : i32
    %c0_i32_1 = arith.constant 0 : i32
    return %c0_i32, %c0_i32_0 : i32, i32
  }
  func.func @transform_8(%arg0: i32) -> (i32, i32) {
    %c0_i32 = arith.constant 0 : i32
    %c0_i32_0 = arith.constant 0 : i32
    %c0_i32_1 = arith.constant 0 : i32
    return %c0_i32, %c0_i32_0 : i32, i32
  }
  func.func @transform_9(%arg0: i32) -> (i32, i32) {
    %c0_i32 = arith.constant 0 : i32
    %c0_i32_0 = arith.constant 0 : i32
    %c0_i32_1 = arith.constant 0 : i32
    return %c0_i32, %c0_i32_0 : i32, i32
  }
}

</mosaic_0001>

<llo_original>
// kernel: tpu_custom_call.1
$region0: #{tpu_custom_call.1}
  #allocation0 [shape = 'u32[]', space=smem, size = 0x4, offset = 0x4, fixed_abs, tag = 'smem constant byte address 0x4 - core index']
  #allocation1 [shape = 'u32[144,128]{1,0:T(1,128)}', space=vmem, size = 0x12000, scoped, tag = 'internal scratch']
  %s0 = inlined_call_operand.vmem [shape: f32[2,32], index: 0, kind: input, shape index: {}]
  %s1 = inlined_call_operand.vmem [shape: f32[2,32], index: 1, kind: input, shape index: {}]
  %s2 = inlined_call_operand.vmem [shape: f32[32,16], index: 2, kind: input, shape index: {}]
  %s3 = inlined_call_operand.vmem [shape: f32[1,16], index: 3, kind: input, shape index: {}]
  %s4 = inlined_call_operand.vmem [shape: f32[32,16], index: 4, kind: input, shape index: {}]
  %s5 = inlined_call_operand.vmem [shape: f32[1,16], index: 5, kind: input, shape index: {}]
  %s6 = inlined_call_operand.vmem [shape: f32[16,16], index: 6, kind: input, shape index: {}]
  %s7 = inlined_call_operand.hbm [shape: f32[2,16], index: 7, kind: output, shape index: {0}]
  %s8 = inlined_call_operand.hbm [shape: f32[2,16], index: 8, kind: output, shape index: {1}]
  %s9 = inlined_call_operand.hbm [shape: f32[2,16], index: 9, kind: output, shape index: {2}]
  %10 = xla_tuple %s7, %s8, %s9
  %s11 = sld [smem:[#allocation0]]
  $region54: #{tpu_custom_call.1} parent=0
    _
  %s13 = ssub.s32 1, %s11
  %s14 = scalar_select 0, %s13, %s11
  $region1: #{tpu_custom_call.1} parent=0
    #allocation2 [shape = 'u8[1024]{0}', space=vmem, size = 0x400, scoped, tag = 'output window, operand 0, single buffered']
    #allocation3 [shape = 's32[1]{0}', space=sflag, size = 0x4, scoped, tag = 'scoped memory for tpu_custom_call.1']
    #allocation4 [shape = 'u8[1024]{0}', space=vmem, size = 0x400, scoped, tag = 'output window, operand 1, single buffered']
    #allocation5 [shape = 's32[1]{0}', space=sflag, size = 0x4, scoped, tag = 'scoped memory for tpu_custom_call.1']
    #allocation6 [shape = 'u8[1024]{0}', space=vmem, size = 0x400, scoped, tag = 'output window, operand 2, single buffered']
    %15 = vsyncpa [#allocation3], 0
    %16 = vsyncpa [#allocation5], 0
    // Predicated region
    $region2: #{tpu_custom_call.1} parent=1 // pred_check
      _
    $region3: #{tpu_custom_call.1} parent=1 // pred_check_branch
      %18 = sbr.rel (0) target = $region5
    $region4: #{tpu_custom_call.1} parent=1 // pred_region
      _
    $region5: #{tpu_custom_call.1} parent=1 // pred_fallthru
      _
    // Predicated region
    $region6: #{tpu_custom_call.1} parent=1 // pred_check
      _
    $region7: #{tpu_custom_call.1} parent=1 // pred_check_branch
      %20 = sbr.rel (0) target = $region9
    $region8: #{tpu_custom_call.1} parent=1 // pred_region
      _
    $region9: #{tpu_custom_call.1} parent=1 // pred_fallthru
      _
    // Predicated region
    $region10: #{tpu_custom_call.1} parent=1 // pred_check
      _
    $region11: #{tpu_custom_call.1} parent=1 // pred_check_branch
      %22 = sbr.rel (0) target = $region13
    $region12: #{tpu_custom_call.1} parent=1 // pred_region
      _
    $region13: #{tpu_custom_call.1} parent=1 // pred_fallthru
      _
    // Predicated region
    $region14: #{tpu_custom_call.1} parent=1 // pred_check
      _
    $region15: #{tpu_custom_call.1} parent=1 // pred_check_branch
      %24 = sbr.rel (0) target = $region17
    $region16: #{tpu_custom_call.1} parent=1 // pred_region
      _
    $region17: #{tpu_custom_call.1} parent=1 // pred_fallthru
      _
    // Predicated region
    $region18: #{tpu_custom_call.1} parent=1 // pred_check
      _
    $region19: #{tpu_custom_call.1} parent=1 // pred_check_branch
      %26 = sbr.rel (0) target = $region21
    $region20: #{tpu_custom_call.1} parent=1 // pred_region
      _
    $region21: #{tpu_custom_call.1} parent=1 // pred_fallthru
      _
    // Predicated region
    $region22: #{tpu_custom_call.1} parent=1 // pred_check
      _
    $region23: #{tpu_custom_call.1} parent=1 // pred_check_branch
      %28 = sbr.rel (0) target = $region25
    $region24: #{tpu_custom_call.1} parent=1 // pred_region
      _
    $region25: #{tpu_custom_call.1} parent=1 // pred_fallthru
      _
    // Predicated region
    $region26: #{tpu_custom_call.1} parent=1 // pred_check
      _
    $region27: #{tpu_custom_call.1} parent=1 // pred_check_branch
      %30 = sbr.rel (0) target = $region29
    $region28: #{tpu_custom_call.1} parent=1 // pred_region
      _
    $region29: #{tpu_custom_call.1} parent=1 // pred_fallthru
      _
    %v31 = vld [vmem:[%s0] sm:$0x3]
    %v32 = vld [vmem:[%s2] sm:$0xff]
    %v33 = vld [vmem:[%s2 + $0x8] sm:$0xff]
    %v34 = vld [vmem:[%s2 + $0x10] sm:$0xff]
    %v35 = vld [vmem:[%s2 + $0x18] sm:$0xff]
    %v36 = vld [vmem:[%s3] sm:$0x1]
    %v38 = vlaneseq
    %v39 = vshrl.u32 %v38, 7
    %v40 = vsub.s32 0, %v39
    %v41 = vrot.slane %v36, %v40
    %vm43 = vcmask 261120
    %v45 = vsel %vm43, %v31, 0
    %47 = vmatprep.subr.mxu0 0.0
    %48 = vmatpush1.msra.mxu0 0.0
    %49 = vmatprep.subr.mxu0 0.0
    %50 = vmatpush1.msra.mxu0 0.0
    %51 = vmatprep.subr.mxu0 0.0
    %52 = vmatpush1.msra.mxu0 0.0
    %53 = vmatprep.subr.mxu0 0.0
    %54 = vmatpush1.msra.mxu0 0.0
    %55 = vmatprep.subr.mxu0 0.0
    %56 = vmatpush1.msra.mxu0 0.0
    %57 = vmatprep.subr.mxu0 0.0
    %58 = vmatpush1.msra.mxu0 0.0
    %59 = vmatprep.subr.mxu0 0.0
    %60 = vmatpush1.msra.mxu0 0.0
    %61 = vmatprep.subr.mxu0 0.0
    %62 = vmatpush1.msra.mxu0 0.0
    %63 = vmatprep.subr.mxu0 0.0
    %64 = vmatpush1.msra.mxu0 0.0
    %65 = vmatprep.subr.mxu0 0.0
    %66 = vmatpush1.msra.mxu0 0.0
    %67 = vmatprep.subr.mxu0 0.0
    %68 = vmatpush1.msra.mxu0 0.0
    %69 = vmatprep.subr.mxu0 0.0
    %70 = vmatpush1.msra.mxu0 0.0
    %71 = vmatprep.subr.mxu0 0.0
    %72 = vmatpush1.msra.mxu0 %v35
    %73 = vmatprep.subr.mxu0 0.0
    %74 = vmatpush1.msra.mxu0 %v34
    %75 = vmatprep.subr.mxu0 0.0
    %76 = vmatpush1.msra.mxu0 %v33
    %77 = vmatprep.subr.mxu0 0.0
    %78 = vmatpush1.msra.mxu0 %v32
    %79 = vmatprep.subr.mxu0 0.0
    %80 = vmatpush2.msra.mxu0 0.0
    %81 = vmatprep.subr.mxu0 0.0
    %82 = vmatpush2.msra.mxu0 0.0
    %83 = vmatprep.subr.mxu0 0.0
    %84 = vmatpush2.msra.mxu0 0.0
    %85 = vmatprep.subr.mxu0 0.0
    %86 = vmatpush2.msra.mxu0 0.0
    %87 = vmatprep.subr.mxu0 0.0
    %88 = vmatpush2.msra.mxu0 0.0
    %89 = vmatprep.subr.mxu0 0.0
    %90 = vmatpush2.msra.mxu0 0.0
    %91 = vmatprep.subr.mxu0 0.0
    %92 = vmatpush2.msra.mxu0 0.0
    %93 = vmatprep.subr.mxu0 0.0
    %94 = vmatpush2.msra.mxu0 0.0
    %95 = vmatprep.subr.mxu0 0.0
    %96 = vmatpush2.msra.mxu0 0.0
    %97 = vmatprep.subr.mxu0 0.0
    %98 = vmatpush2.msra.mxu0 0.0
    %99 = vmatprep.subr.mxu0 0.0
    %100 = vmatpush2.msra.mxu0 0.0
    %101 = vmatprep.subr.mxu0 0.0
    %102 = vmatpush2.msra.mxu0 0.0
    %103 = vmatprep.subr.mxu0 0.0
    %104 = vmatpush2.msra.mxu0 0.0
    %105 = vmatprep.subr.mxu0 0.0
    %106 = vmatpush2.msra.mxu0 0.0
    %107 = vmatprep.subr.mxu0 0.0
    %108 = vmatpush2.msra.mxu0 0.0
    %109 = vmatprep.subr.mxu0 0.0
    %110 = vmatpush2.msra.mxu0 0.0
    %111 = vmatprep.mubr.f32.mxu0 0.0
    %112 = vmatmul.mubr.f32.gmra.mxu0 %v45
    %v113 = vpop.f32.mrf.mxu0
    %v114 = vadd.f32 %v41, %v113
    %v115 = vpop.f32.mrf.mxu0
    %116 = vdwg.mxu0
    %v117 = vmul.f32 %v114, %v114
    %vm118 = vcmask 123904
    %v119 = vsel %vm118, %v117, 0.0
    %120 = vadd.xlane.f32.xlu0 %v119
    %v121 = vpop.xlane.xlu0 %120
    %v122 = vrot.slane %v121, 4
    %v123 = vadd.f32 %v121, %v122
    %v124 = vrot.slane %v123, 2
    %v125 = vadd.f32 %v123, %v124
    %v126 = vrot.slane %v125, 1
    %v127 = vadd.f32 %v125, %v126
    %s128 = vtos %v127
    %v129 = vrcp.pop 32.0
    %s130 = vtos %v129
    %s131 = smul.f32 %s128, %s130
    %v132 = vstv %s131
    %v133 = vrsqrt.pop %v132
    %s134 = vtos %v133
    %v135 = vstv %s134
    %v136 = vmul.f32 %v114, %v135
    %137 = vst.msk [vmem:[#allocation2] sm:$0x3] %vm118, %v136
    %v138 = vmul.f32 %v136, %v136
    %v139 = vld [vmem:[%s6] sm:$0xff]
    %v140 = vld [vmem:[%s6 + $0x8] sm:$0xff]
    %vm141 = vcmask 130048
    %v143 = vsel %vm141, %v138, 0
    %145 = vmatprep.subr.mxu0 0.0
    %146 = vmatpush1.msra.mxu0 0.0
    %147 = vmatprep.subr.mxu0 0.0
    %148 = vmatpush1.msra.mxu0 0.0
    %149 = vmatprep.subr.mxu0 0.0
    %150 = vmatpush1.msra.mxu0 0.0
    %151 = vmatprep.subr.mxu0 0.0
    %152 = vmatpush1.msra.mxu0 0.0
    %153 = vmatprep.subr.mxu0 0.0
    %154 = vmatpush1.msra.mxu0 0.0
    %155 = vmatprep.subr.mxu0 0.0
    %156 = vmatpush1.msra.mxu0 0.0
    %157 = vmatprep.subr.mxu0 0.0
    %158 = vmatpush1.msra.mxu0 0.0
    %159 = vmatprep.subr.mxu0 0.0
    %160 = vmatpush1.msra.mxu0 0.0
    %161 = vmatprep.subr.mxu0 0.0
    %162 = vmatpush1.msra.mxu0 0.0
    %163 = vmatprep.subr.mxu0 0.0
    %164 = vmatpush1.msra.mxu0 0.0
    %165 = vmatprep.subr.mxu0 0.0
    %166 = vmatpush1.msra.mxu0 0.0
    %167 = vmatprep.subr.mxu0 0.0
    %168 = vmatpush1.msra.mxu0 0.0
    %169 = vmatprep.subr.mxu0 0.0
    %170 = vmatpush1.msra.mxu0 0.0
    %171 = vmatprep.subr.mxu0 0.0
    %172 = vmatpush1.msra.mxu0 0.0
    %173 = vmatprep.subr.mxu0 0.0
    %174 = vmatpush1.msra.mxu0 %v140
    %175 = vmatprep.subr.mxu0 0.0
    %176 = vmatpush1.msra.mxu0 %v139
    %177 = vmatprep.subr.mxu0 0.0
    %178 = vmatpush2.msra.mxu0 0.0
    %179 = vmatprep.subr.mxu0 0.0
    %180 = vmatpush2.msra.mxu0 0.0
    %181 = vmatprep.subr.mxu0 0.0
    %182 = vmatpush2.msra.mxu0 0.0
    %183 = vmatprep.subr.mxu0 0.0
    %184 = vmatpush2.msra.mxu0 0.0
    %185 = vmatprep.subr.mxu0 0.0
    %186 = vmatpush2.msra.mxu0 0.0
    %187 = vmatprep.subr.mxu0 0.0
    %188 = vmatpush2.msra.mxu0 0.0
    %189 = vmatprep.subr.mxu0 0.0
    %190 = vmatpush2.msra.mxu0 0.0
    %191 = vmatprep.subr.mxu0 0.0
    %192 = vmatpush2.msra.mxu0 0.0
    %193 = vmatprep.subr.mxu0 0.0
    %194 = vmatpush2.msra.mxu0 0.0
    %195 = vmatprep.subr.mxu0 0.0
    %196 = vmatpush2.msra.mxu0 0.0
    %197 = vmatprep.subr.mxu0 0.0
    %198 = vmatpush2.msra.mxu0 0.0
    %199 = vmatprep.subr.mxu0 0.0
    %200 = vmatpush2.msra.mxu0 0.0
    %201 = vmatprep.subr.mxu0 0.0
    %202 = vmatpush2.msra.mxu0 0.0
    %203 = vmatprep.subr.mxu0 0.0
    %204 = vmatpush2.msra.mxu0 0.0
    %205 = vmatprep.subr.mxu0 0.0
    %206 = vmatpush2.msra.mxu0 0.0
    %207 = vmatprep.subr.mxu0 0.0
    %208 = vmatpush2.msra.mxu0 0.0
    %209 = vmatprep.mubr.f32.mxu0 0.0
    %210 = vmatmul.mubr.f32.gmra.mxu0 %v143
    %v211 = vpop.f32.mrf.mxu0
    %v212 = vadd.f32 1e-08, %v211
    %v213 = vpop.f32.mrf.mxu0
    %214 = vdwg.mxu0
    %v215 = vrsqrt.pop %v212
    %216 = vst.msk [vmem:[#allocation4] sm:$0x3] %vm118, %v215
    %v217 = vld [vmem:[%s1] sm:$0x3]
    %v218 = vld [vmem:[%s4] sm:$0xff]
    %v219 = vld [vmem:[%s4 + $0x8] sm:$0xff]
    %v220 = vld [vmem:[%s4 + $0x10] sm:$0xff]
    %v221 = vld [vmem:[%s4 + $0x18] sm:$0xff]
    %v222 = vld [vmem:[%s5] sm:$0x1]
    %v224 = vlaneseq
    %v225 = vshrl.u32 %v224, 7
    %v226 = vsub.s32 0, %v225
    %v227 = vrot.slane %v222, %v226
    %v230 = vsel %vm43, %v217, 0
    %232 = vmatprep.subr.mxu0 0.0
    %233 = vmatpush1.msra.mxu0 0.0
    %234 = vmatprep.subr.mxu0 0.0
    %235 = vmatpush1.msra.mxu0 0.0
    %236 = vmatprep.subr.mxu0 0.0
    %237 = vmatpush1.msra.mxu0 0.0
    %238 = vmatprep.subr.mxu0 0.0
    %239 = vmatpush1.msra.mxu0 0.0
    %240 = vmatprep.subr.mxu0 0.0
    %241 = vmatpush1.msra.mxu0 0.0
    %242 = vmatprep.subr.mxu0 0.0
    %243 = vmatpush1.msra.mxu0 0.0
    %244 = vmatprep.subr.mxu0 0.0
    %245 = vmatpush1.msra.mxu0 0.0
    %246 = vmatprep.subr.mxu0 0.0
    %247 = vmatpush1.msra.mxu0 0.0
    %248 = vmatprep.subr.mxu0 0.0
    %249 = vmatpush1.msra.mxu0 0.0
    %250 = vmatprep.subr.mxu0 0.0
    %251 = vmatpush1.msra.mxu0 0.0
    %252 = vmatprep.subr.mxu0 0.0
    %253 = vmatpush1.msra.mxu0 0.0
    %254 = vmatprep.subr.mxu0 0.0
    %255 = vmatpush1.msra.mxu0 0.0
    %256 = vmatprep.subr.mxu0 0.0
    %257 = vmatpush1.msra.mxu0 %v221
    %258 = vmatprep.subr.mxu0 0.0
    %259 = vmatpush1.msra.mxu0 %v220
    %260 = vmatprep.subr.mxu0 0.0
    %261 = vmatpush1.msra.mxu0 %v219
    %262 = vmatprep.subr.mxu0 0.0
    %263 = vmatpush1.msra.mxu0 %v218
    %264 = vmatprep.subr.mxu0 0.0
    %265 = vmatpush2.msra.mxu0 0.0
    %266 = vmatprep.subr.mxu0 0.0
    %267 = vmatpush2.msra.mxu0 0.0
    %268 = vmatprep.subr.mxu0 0.0
    %269 = vmatpush2.msra.mxu0 0.0
    %270 = vmatprep.subr.mxu0 0.0
    %271 = vmatpush2.msra.mxu0 0.0
    %272 = vmatprep.subr.mxu0 0.0
    %273 = vmatpush2.msra.mxu0 0.0
    %274 = vmatprep.subr.mxu0 0.0
    %275 = vmatpush2.msra.mxu0 0.0
    %276 = vmatprep.subr.mxu0 0.0
    %277 = vmatpush2.msra.mxu0 0.0
    %278 = vmatprep.subr.mxu0 0.0
    %279 = vmatpush2.msra.mxu0 0.0
    %280 = vmatprep.subr.mxu0 0.0
    %281 = vmatpush2.msra.mxu0 0.0
    %282 = vmatprep.subr.mxu0 0.0
    %283 = vmatpush2.msra.mxu0 0.0
    %284 = vmatprep.subr.mxu0 0.0
    %285 = vmatpush2.msra.mxu0 0.0
    %286 = vmatprep.subr.mxu0 0.0
    %287 = vmatpush2.msra.mxu0 0.0
    %288 = vmatprep.subr.mxu0 0.0
    %289 = vmatpush2.msra.mxu0 0.0
    %290 = vmatprep.subr.mxu0 0.0
    %291 = vmatpush2.msra.mxu0 0.0
    %292 = vmatprep.subr.mxu0 0.0
    %293 = vmatpush2.msra.mxu0 0.0
    %294 = vmatprep.subr.mxu0 0.0
    %295 = vmatpush2.msra.mxu0 0.0
    %296 = vmatprep.mubr.f32.mxu0 0.0
    %297 = vmatmul.mubr.f32.gmra.mxu0 %v230
    %v298 = vpop.f32.mrf.mxu0
    %v299 = vadd.f32 %v227, %v298
    %v300 = vpop.f32.mrf.mxu0
    %301 = vdwg.mxu0
    %302 = vst.msk [vmem:[#allocation6] sm:$0x3] %vm118, %v299
    // Predicated region
    $region30: #{tpu_custom_call.1} parent=1 // pred_check
      _
    $region31: #{tpu_custom_call.1} parent=1 // pred_check_branch
      %304 = sbr.rel (0) target = $region33
    $region32: #{tpu_custom_call.1} parent=1 // pred_region
      %s306 = ssub.s32 32, 32
      %307 = vsyncadd [#allocation3], %s306
      %s309 = sshll.u32 [#allocation2], 4
      %s310 = int_to_ptr.vmem [resolvable:$true] %s309
      %312 = dma.vmem_to_hbm [thread:$0]  %s310, 32, %s7, [#allocation3]
    $region33: #{tpu_custom_call.1} parent=1 // pred_fallthru
      _
    // Predicated region
    $region34: #{tpu_custom_call.1} parent=1 // pred_check
      _
    $region35: #{tpu_custom_call.1} parent=1 // pred_check_branch
      %314 = sbr.rel (0) target = $region37
    $region36: #{tpu_custom_call.1} parent=1 // pred_region
      %s316 = ssub.s32 32, 32
      %317 = vsyncadd [#allocation5], %s316
      %s319 = sshll.u32 [#allocation4], 4
      %s320 = int_to_ptr.vmem [resolvable:$true] %s319
      %322 = dma.vmem_to_hbm [thread:$0]  %s320, 32, %s8, [#allocation5]
    $region37: #{tpu_custom_call.1} parent=1 // pred_fallthru
      _
    // Predicated region
    $region38: #{tpu_custom_call.1} parent=1 // pred_check
      _
    $region39: #{tpu_custom_call.1} parent=1 // pred_check_branch
      %324 = sbr.rel (0) target = $region41
    $region40: #{tpu_custom_call.1} parent=1 // pred_region
      %s326 = ssub.s32 32, 32
      %327 = vsyncadd [#allocation5], %s326
      %s329 = sshll.u32 [#allocation6], 4
      %s330 = int_to_ptr.vmem [resolvable:$true] %s329
      %332 = dma.vmem_to_hbm [thread:$0]  %s330, 32, %s9, [#allocation5]
    $region41: #{tpu_custom_call.1} parent=1 // pred_fallthru
      _
    // Predicated region
    $region42: #{tpu_custom_call.1} parent=1 // pred_check
      _
    $region43: #{tpu_custom_call.1} parent=1 // pred_check_branch
      %334 = sbr.rel (0) target = $region45
    $region44: #{tpu_custom_call.1} parent=1 // pred_region
      %335 = dma.done [#allocation3], 32
    $region45: #{tpu_custom_call.1} parent=1 // pred_fallthru
      _
    // Predicated region
    $region46: #{tpu_custom_call.1} parent=1 // pred_check
      _
    $region47: #{tpu_custom_call.1} parent=1 // pred_check_branch
      %337 = sbr.rel (0) target = $region49
    $region48: #{tpu_custom_call.1} parent=1 // pred_region
      %338 = dma.done [#allocation5], 32
    $region49: #{tpu_custom_call.1} parent=1 // pred_fallthru
      _
    // Predicated region
    $region50: #{tpu_custom_call.1} parent=1 // pred_check
      _
    $region51: #{tpu_custom_call.1} parent=1 // pred_check_branch
      %340 = sbr.rel (0) target = $region53
    $region52: #{tpu_custom_call.1} parent=1 // pred_region
      %341 = dma.done [#allocation5], 32
    $region53: #{tpu_custom_call.1} parent=1 // pred_fallthru
      _
    %342 = vsyncpa [#allocation3], 1
    %343 = vsyncpa [#allocation5], 1

</llo_original>
